<compile_context>
chip_gen: v5e
topology: v5e:2x2
jax: 0.10.0
libtpu: 0.0.40
codegen_flags: <defaults>
</compile_context>

<pallas_src>
import functools

import jax
import jax.numpy as jnp
from jax.experimental import pallas as pl
from jax.experimental.pallas import tpu as pltpu

_LANE = 128


def _ru(x, m):
    return ((x + m - 1) // m) * m


def _cdiv(a, b):
    return -(-a // b)


def _linear_kernel(x_ref, w_ref, b_ref, o_ref, m_ref, *,
                   kt, tf, n_feature, nchunk, ragged_f):
    """One (batch-tile, feature-tile) grid step.

    x_ref : (tb, tf)  VMEM  -- batch tile of inputs (last batch tile may be ragged)
    w_ref : (kt, tf)  VMEM  -- resident weight, row k = feature slice of step k
    b_ref : (1, 1)    SMEM  -- bias scalar
    o_ref : (1, tb)         -- lane-dense output row (batch along lanes)
    m_ref : (128,128) f32 VMEM scratch -- cross-k accumulator (used when kt > 1)
    """
    k = pl.program_id(1)

    # Resident weight: slice this step's feature tile (dynamic sublane index).
    if kt > 1:
        w = w_ref[pl.ds(k, 1), :].astype(jnp.float32)      # (1, tf)
    else:
        w = w_ref[...].astype(jnp.float32)                 # (1, tf)

    if ragged_f:
        # Mask OOB feature columns of the (ragged) last feature tile: garbage
        # there would otherwise corrupt valid row sums.
        fidx = jax.lax.broadcasted_iota(jnp.int32, (1, tf), 1)
        valid = (k * tf + fidx) < n_feature                # (1, tf)

    lane = jax.lax.broadcasted_iota(jnp.int32, (_LANE, _LANE), 1)

    # Per 128-row chunk: VPU multiply + lane (XLU) reduce -> (128, 1) column,
    # inserted as lane-column c of a (128,128) matrix held in vregs (select
    # only, no exotic stores).  One transpose per batch tile relayouts it.
    m = jnp.zeros((_LANE, _LANE), jnp.float32)
    for c in range(nchunk):
        xc = x_ref[pl.ds(c * _LANE, _LANE), :].astype(jnp.float32)  # (128, tf)
        xw = xc * w
        if ragged_f:
            xw = jnp.where(valid, xw, 0.0)
        pc = jnp.sum(xw, axis=-1, keepdims=True)                    # (128, 1)
        m = jnp.where(lane == c, pc, m)

    if kt > 1:
        @pl.when(k == 0)
        def _():
            m_ref[...] = m

        @pl.when(k > 0)
        def _():
            m_ref[...] += m

    def _finalize():
        acc = m_ref[...] if kt > 1 else m                  # (128, 128)
        bias = b_ref[0, 0]                                 # SMEM scalar read
        mt = acc.T + bias                                  # one XLU transpose / tile
        for c in range(nchunk):
            # row c of mt = outputs for batch rows c*128 .. c*128+127
            o_ref[:, c * _LANE:(c + 1) * _LANE] = mt[c:c + 1, :].astype(o_ref.dtype)

    if kt > 1:
        pl.when(k == kt - 1)(_finalize)
    else:
        _finalize()


def linear_net_forward(x, weight, bias):
    """x: (B, F); weight: (1, F) (PyTorch nn.Linear layout); bias: (1,)."""
    B, F = x.shape
    assert weight.shape == (1, F) and bias.shape == (1,)

    # ---- feature (reduction) tiling ----
    if F <= 2048:
        tf, kt, ragged_f = F, 1, False
    else:
        tf = next((t for t in (2048, 1024, 512, 256, 128) if F % t == 0), 0)
        if tf:
            kt, ragged_f = F // tf, False
        else:
            tf = 2048
            kt, ragged_f = _cdiv(F, tf), True              # masked feature tail

    # ---- batch tiling: ~4 MiB x block (VMEM footprint uses lane-padded tf) ----
    tf_pad = _ru(tf, _LANE)
    tb = (4 * 1024 * 1024) // (4 * tf_pad)
    tb = max(_LANE, (tb // _LANE) * _LANE)
    tb = min(tb, 128 * _LANE)                              # one (128,128) relayout matrix
    tb = min(tb, _ru(B, _LANE))                            # never larger than one padded tile
    half = _ru(_cdiv(B, 2), _LANE)
    if half >= 512:                                        # v7x: >= 2 tiles for its 2 TCs
        tb = min(tb, half)
    g = _cdiv(B, tb)                                       # ragged last tile; no jnp.pad of x
    nchunk = tb // _LANE

    # Weight: zero-pad the (tiny) feature tail if needed and reshape to (kt, tf)
    # so it stays VMEM-resident (constant index_map) and is sliced per k step.
    f_pad = kt * tf
    w = weight.astype(jnp.float32)
    if f_pad != F:
        w = jnp.pad(w, ((0, 0), (0, f_pad - F)))
    w = w.reshape(kt, tf)

    bias2d = bias.reshape(1, 1).astype(jnp.float32)

    # Explicit VMEM budget: double-buffered x + out, resident weight, scratch.
    x_block_bytes = 4 * tb * tf_pad
    out_block_bytes = 4 * 8 * tb
    w_bytes = 4 * _ru(kt, 8) * tf_pad
    vmem_limit = 2 * x_block_bytes + 2 * out_block_bytes + w_bytes \
        + _LANE * _LANE * 4 + (4 << 20)
    vmem_limit = int(min(max(vmem_limit, 16 << 20), 30 << 20))

    out = pl.pallas_call(
        functools.partial(_linear_kernel, kt=kt, tf=tf, n_feature=F,
                          nchunk=nchunk, ragged_f=ragged_f),
        out_shape=jax.ShapeDtypeStruct((1, g * tb), jnp.float32),
        grid=(g, kt),
        in_specs=[
            pl.BlockSpec((tb, tf), lambda i, k: (i, k)),          # x tile
            pl.BlockSpec((kt, tf), lambda i, k: (0, 0)),          # resident weight
            pl.BlockSpec(memory_space=pltpu.MemorySpace.SMEM),    # bias scalar
        ],
        out_specs=pl.BlockSpec((1, tb), lambda i, k: (0, i)),     # lane-dense slab
        scratch_shapes=[pltpu.VMEM((_LANE, _LANE), jnp.float32)],
        compiler_params=pltpu.CompilerParams(
            dimension_semantics=("parallel", "arbitrary"),
            vmem_limit_bytes=vmem_limit),
        cost_estimate=pl.CostEstimate(
            flops=2 * B * F,
            transcendentals=0,
            bytes_accessed=4 * (B * F + F + B)),
    )(x, w, bias2d)

    # (1, g*tb) lane-dense slab -> (B, 1), dropping ragged-tile padding.
    return out[0, :B].reshape(B, 1)


if __name__ == "__main__":
    key = jax.random.PRNGKey(0)
    kx, kw, kb = jax.random.split(key, 3)

    batch = 8
    n_feature = 32

    x = jax.random.normal(kx, (batch, n_feature), dtype=jnp.float32)
    # Mimic nn.Linear's uniform(-1/sqrt(F), 1/sqrt(F)) init, deterministically.
    bound = 1.0 / (n_feature ** 0.5)
    weight = jax.random.uniform(kw, (1, n_feature), minval=-bound, maxval=bound,
                                dtype=jnp.float32)
    bias = jax.random.uniform(kb, (1,), minval=-bound, maxval=bound,
                              dtype=jnp.float32)

    y = linear_net_forward(x, weight, bias)
    jax.block_until_ready(y)

    # Reference: same math as PyTorch nn.Linear forward.
    y_ref = x @ weight.T + bias
    assert y.shape == (batch, 1)
    assert jnp.allclose(y, y_ref, atol=1e-5, rtol=1e-5)

    print("KERNEL_OK")
</pallas_src>

<mosaic_0001>
module attributes {stable_mosaic.version = 11 : i64} {
  func.func @_linear_kernel(%arg0: i32, %arg1: i32, %arg2: memref<128x32xf32, #tpu.memory_space<vmem>>, %arg3: memref<1x32xf32, #tpu.memory_space<vmem>>, %arg4: memref<1x1xf32, #tpu.memory_space<smem>>, %arg5: memref<1x128xf32, #tpu.memory_space<vmem>>, %arg6: memref<128x128xf32, #tpu.memory_space<vmem>>) attributes {dimension_semantics = [#tpu.dimension_semantics<parallel>, #tpu.dimension_semantics<arbitrary>], iteration_bounds = array<i64: 1, 1>, scalar_prefetch = 0 : i64, scratch_operands = 1 : i64, tpu.core_type = #tpu.core_type<tc>, window_params = [{transform_indices = @transform_0, window_bounds = array<i64: 128, 32>}, {pipeline_mode = #tpu.pipeline_mode<synchronous>, transform_indices = @transform_1, window_bounds = array<i64: 1, 32>}, {transform_indices = @transform_2, window_bounds = array<i64: 1, 1>}, {transform_indices = @transform_3, window_bounds = array<i64: 1, 128>}]} {
    %c0 = arith.constant 0 : index
    %c0_0 = arith.constant 0 : index
    %0 = vector.load %arg3[%c0, %c0_0] : memref<1x32xf32, #tpu.memory_space<vmem>>, vector<1x32xf32>
    %1 = tpu.iota {dimensions = array<i32: 1>} : vector<128x128xi32>
    %cst = arith.constant 0.000000e+00 : f32
    %2 = vector.broadcast %cst : f32 to vector<128x128xf32>
    %c0_1 = arith.constant 0 : index
    %c0_2 = arith.constant 0 : index
    %3 = vector.load %arg2[%c0_1, %c0_2] : memref<128x32xf32, #tpu.memory_space<vmem>>, vector<128x32xf32>
    %4 = vector.broadcast %0 : vector<1x32xf32> to vector<128x32xf32>
    %5 = arith.mulf %3, %4 : vector<128x32xf32>
    %cst_3 = arith.constant dense<0.000000e+00> : vector<128xf32>
    %6 = vector.multi_reduction <add>, %5, %cst_3 [1] : vector<128x32xf32> to vector<128xf32>
    %7 = vector.shape_cast %6 : vector<128xf32> to vector<128x1xf32>
    %c0_i32 = arith.constant 0 : i32
    %8 = vector.broadcast %c0_i32 : i32 to vector<128x128xi32>
    %9 = arith.cmpi eq, %1, %8 : vector<128x128xi32>
    %10 = vector.shape_cast %7 : vector<128x1xf32> to vector<128x1xf32>
    %11 = vector.broadcast %10 : vector<128x1xf32> to vector<128x128xf32>
    %12 = arith.select %9, %11, %2 : vector<128x128xi1>, vector<128x128xf32>
    %c0_4 = arith.constant 0 : index
    %c0_5 = arith.constant 0 : index
    %13 = memref.load %arg4[%c0_4, %c0_5] : memref<1x1xf32, #tpu.memory_space<smem>>
    %14 = tpu.transpose %12, [1, 0] : vector<128x128xf32> -> vector<128x128xf32>
    %15 = vector.broadcast %13 : f32 to vector<128x128xf32>
    %16 = arith.addf %14, %15 : vector<128x128xf32>
    %17 = vector.extract_strided_slice %16 {offsets = [0, 0], sizes = [1, 128], strides = [1, 1]} : vector<128x128xf32> to vector<1x128xf32>
    %c0_6 = arith.constant 0 : index
    %c0_7 = arith.constant 0 : index
    %18 = vector.load %arg5[%c0_6, %c0_7] : memref<1x128xf32, #tpu.memory_space<vmem>>, vector<1x128xf32>
    tpu.vector_store %arg5[%c0_6, %c0_7], %17 {strides = array<i32>} : memref<1x128xf32, #tpu.memory_space<vmem>>, vector<1x128xf32>,
    return
  }
  func.func @transform_0(%arg0: i32, %arg1: i32) -> (i32, i32) {
    %c0_i32 = arith.constant 0 : i32
    return %arg0, %arg1 : i32, i32
  }
  func.func @transform_1(%arg0: i32, %arg1: i32) -> (i32, i32) {
    %c0_i32 = arith.constant 0 : i32
    %c0_i32_0 = arith.constant 0 : i32
    %c0_i32_1 = arith.constant 0 : i32
    return %c0_i32, %c0_i32_0 : i32, i32
  }
  func.func @transform_2(%arg0: i32, %arg1: i32) -> (i32, i32) {
    %c0_i32 = arith.constant 0 : i32
    %c0_i32_0 = arith.constant 0 : i32
    %c0_i32_1 = arith.constant 0 : i32
    return %c0_i32, %c0_i32_0 : i32, i32
  }
  func.func @transform_3(%arg0: i32, %arg1: i32) -> (i32, i32) {
    %c0_i32 = arith.constant 0 : i32
    %c0_i32_0 = arith.constant 0 : i32
    return %c0_i32, %arg0 : i32, i32
  }
}

</mosaic_0001>

<llo_original>
// kernel: tpu_custom_call.1
$region0: #{tpu_custom_call.1}
  #allocation0 [shape = 'u32[]', space=smem, size = 0x4, offset = 0x4, fixed_abs, tag = 'smem constant byte address 0x4 - core index']
  #allocation1 [shape = 'u32[72,128]{1,0:T(1,128)}', space=vmem, size = 0x9000, scoped, tag = 'internal scratch']
  #allocation2 [shape = 'f32[128,128]{1,0:T(8,128)}', space=vmem, size = 0x10000, scoped, tag = 'scratch operand']
  #allocation3 [shape = 'f32[1,1]{1,0:T(1,128)S(6)}', space=smem, size = 0x200, scoped, tag = 'scoped memory for tpu_custom_call.1']
  %s0 = inlined_call_operand.hbm [shape: f32[8,32], index: 0, kind: input, shape index: {}]
  %s1 = inlined_call_operand.vmem [shape: f32[1,32], index: 1, kind: input, shape index: {}]
  %s2 = inlined_call_operand.<no memory space> [shape: f32[1,1], index: 2, kind: input, shape index: {}]
  %s3 = inlined_call_operand.hbm [shape: f32[1,128], index: 3, kind: output, shape index: {}]
  %s4 = sld [smem:[#allocation0]]
  $region26: #{tpu_custom_call.1} parent=0
    _
  %s6 = ssub.s32 1, %s4
  %s7 = scalar_select 0, %s6, %s4
  %8 = sst [smem:[#allocation3]] %s2
  $region1: #{tpu_custom_call.1} parent=0
    #allocation4 [shape = 'u8[65536]{0}', space=vmem, size = 0x10000, scoped, tag = 'input window, operand 0, single buffered']
    #allocation5 [shape = 's32[1]{0}', space=sflag, size = 0x4, scoped, tag = 'scoped memory for tpu_custom_call.1']
    #allocation6 [shape = 's32[1]{0}', space=sflag, size = 0x4, scoped, tag = 'scoped memory for tpu_custom_call.1']
    #allocation7 [shape = 'u8[512]{0}', space=vmem, size = 0x400, scoped, tag = 'output window, operand 0, single buffered']
    %9 = vsyncpa [#allocation5], 0
    %10 = vsyncpa [#allocation6], 0
    // Predicated region
    $region2: #{tpu_custom_call.1} parent=1 // pred_check
      _
    $region3: #{tpu_custom_call.1} parent=1 // pred_check_branch
      %12 = sbr.rel (0) target = $region5
    $region4: #{tpu_custom_call.1} parent=1 // pred_region
      %14 = vsyncadd [#allocation5], 1920
      %s15 = sshll.u32 %s0, 4
      %s16 = int_to_ptr.hbm [resolvable:$true] %s15
      %s17 = sshll.u32 [#allocation4], 4
      %s18 = int_to_ptr.vmem [resolvable:$true] %s17
      %23 = dma.hbm_to_vmem [thread:$0]  %s16, 128, %s18, [#allocation5], 128, 128, 8
    $region5: #{tpu_custom_call.1} parent=1 // pred_fallthru
      _
    // Predicated region
    $region6: #{tpu_custom_call.1} parent=1 // pred_check
      _
    $region7: #{tpu_custom_call.1} parent=1 // pred_check_branch
      %25 = sbr.rel (0) target = $region9
    $region8: #{tpu_custom_call.1} parent=1 // pred_region
      _
    $region9: #{tpu_custom_call.1} parent=1 // pred_fallthru
      _
    // Predicated region
    $region10: #{tpu_custom_call.1} parent=1 // pred_check
      _
    $region11: #{tpu_custom_call.1} parent=1 // pred_check_branch
      %27 = sbr.rel (0) target = $region13
    $region12: #{tpu_custom_call.1} parent=1 // pred_region
      _
    $region13: #{tpu_custom_call.1} parent=1 // pred_fallthru
      _
    // Predicated region
    $region14: #{tpu_custom_call.1} parent=1 // pred_check
      _
    $region15: #{tpu_custom_call.1} parent=1 // pred_check_branch
      %29 = sbr.rel (0) target = $region17
    $region16: #{tpu_custom_call.1} parent=1 // pred_region
      %31 = dma.done [#allocation5], 2048
    $region17: #{tpu_custom_call.1} parent=1 // pred_fallthru
      _
    %v32 = vld [vmem:[%s1] sm:$0x1]
    %v33 = vlaneseq
    %v34 = vand.u32 %v33, 127
    %v35 = vld [vmem:[#allocation4] sm:$0xff]
    %v36 = vld [vmem:[#allocation4 + $0x8] sm:$0xff]
    %v37 = vld [vmem:[#allocation4 + $0x10] sm:$0xff]
    %v38 = vld [vmem:[#allocation4 + $0x18] sm:$0xff]
    %v39 = vld [vmem:[#allocation4 + $0x20] sm:$0xff]
    %v40 = vld [vmem:[#allocation4 + $0x28] sm:$0xff]
    %v41 = vld [vmem:[#allocation4 + $0x30] sm:$0xff]
    %v42 = vld [vmem:[#allocation4 + $0x38] sm:$0xff]
    %v43 = vld [vmem:[#allocation4 + $0x40] sm:$0xff]
    %v44 = vld [vmem:[#allocation4 + $0x48] sm:$0xff]
    %v45 = vld [vmem:[#allocation4 + $0x50] sm:$0xff]
    %v46 = vld [vmem:[#allocation4 + $0x58] sm:$0xff]
    %v47 = vld [vmem:[#allocation4 + $0x60] sm:$0xff]
    %v48 = vld [vmem:[#allocation4 + $0x68] sm:$0xff]
    %v49 = vld [vmem:[#allocation4 + $0x70] sm:$0xff]
    %v50 = vld [vmem:[#allocation4 + $0x78] sm:$0xff]
    %v52 = vperm.slane %v32, 0
    %v54 = vmul.f32 %v35, %v52
    %v55 = vmul.f32 %v36, %v52
    %v56 = vmul.f32 %v37, %v52
    %v57 = vmul.f32 %v38, %v52
    %v58 = vmul.f32 %v39, %v52
    %v59 = vmul.f32 %v40, %v52
    %v60 = vmul.f32 %v41, %v52
    %v61 = vmul.f32 %v42, %v52
    %v62 = vmul.f32 %v43, %v52
    %v63 = vmul.f32 %v44, %v52
    %v64 = vmul.f32 %v45, %v52
    %v65 = vmul.f32 %v46, %v52
    %v66 = vmul.f32 %v47, %v52
    %v67 = vmul.f32 %v48, %v52
    %v68 = vmul.f32 %v49, %v52
    %v69 = vmul.f32 %v50, %v52
    %vm70 = vcmask 261120
    %v71 = vsel %vm70, %v54, 0.0
    %72 = vadd.xlane.f32.xlu0 %v71
    %v73 = vpop.xlane.xlu0 %72
    %v74 = vsel %vm70, %v55, 0.0
    %75 = vadd.xlane.f32.xlu0 %v74
    %v76 = vpop.xlane.xlu0 %75
    %v77 = vsel %vm70, %v56, 0.0
    %78 = vadd.xlane.f32.xlu0 %v77
    %v79 = vpop.xlane.xlu0 %78
    %v80 = vsel %vm70, %v57, 0.0
    %81 = vadd.xlane.f32.xlu0 %v80
    %v82 = vpop.xlane.xlu0 %81
    %v83 = vsel %vm70, %v58, 0.0
    %84 = vadd.xlane.f32.xlu0 %v83
    %v85 = vpop.xlane.xlu0 %84
    %v86 = vsel %vm70, %v59, 0.0
    %87 = vadd.xlane.f32.xlu0 %v86
    %v88 = vpop.xlane.xlu0 %87
    %v89 = vsel %vm70, %v60, 0.0
    %90 = vadd.xlane.f32.xlu0 %v89
    %v91 = vpop.xlane.xlu0 %90
    %v92 = vsel %vm70, %v61, 0.0
    %93 = vadd.xlane.f32.xlu0 %v92
    %v94 = vpop.xlane.xlu0 %93
    %v95 = vsel %vm70, %v62, 0.0
    %96 = vadd.xlane.f32.xlu0 %v95
    %v97 = vpop.xlane.xlu0 %96
    %v98 = vsel %vm70, %v63, 0.0
    %99 = vadd.xlane.f32.xlu0 %v98
    %v100 = vpop.xlane.xlu0 %99
    %v101 = vsel %vm70, %v64, 0.0
    %102 = vadd.xlane.f32.xlu0 %v101
    %v103 = vpop.xlane.xlu0 %102
    %v104 = vsel %vm70, %v65, 0.0
    %105 = vadd.xlane.f32.xlu0 %v104
    %v106 = vpop.xlane.xlu0 %105
    %v107 = vsel %vm70, %v66, 0.0
    %108 = vadd.xlane.f32.xlu0 %v107
    %v109 = vpop.xlane.xlu0 %108
    %v110 = vsel %vm70, %v67, 0.0
    %111 = vadd.xlane.f32.xlu0 %v110
    %v112 = vpop.xlane.xlu0 %111
    %v113 = vsel %vm70, %v68, 0.0
    %114 = vadd.xlane.f32.xlu0 %v113
    %v115 = vpop.xlane.xlu0 %114
    %v116 = vsel %vm70, %v69, 0.0
    %117 = vadd.xlane.f32.xlu0 %v116
    %v118 = vpop.xlane.xlu0 %117
    %vm119 = vcmp.eq.s32.totalorder %v34, 0
    %v120 = vsel %vm119, %v73, 0.0
    %v121 = vsel %vm119, %v76, 0.0
    %v122 = vsel %vm119, %v79, 0.0
    %v123 = vsel %vm119, %v82, 0.0
    %v124 = vsel %vm119, %v85, 0.0
    %v125 = vsel %vm119, %v88, 0.0
    %v126 = vsel %vm119, %v91, 0.0
    %v127 = vsel %vm119, %v94, 0.0
    %v128 = vsel %vm119, %v97, 0.0
    %v129 = vsel %vm119, %v100, 0.0
    %v130 = vsel %vm119, %v103, 0.0
    %v131 = vsel %vm119, %v106, 0.0
    %v132 = vsel %vm119, %v109, 0.0
    %v133 = vsel %vm119, %v112, 0.0
    %v134 = vsel %vm119, %v115, 0.0
    %v135 = vsel %vm119, %v118, 0.0
    %s136 = sld [smem:[#allocation3]]
    %137 = vxpose.xlu0.b32.start [1/16] %v120, 128
    %138 = vxpose.xlu0.b32.cont [2/16] %v121, 128
    %139 = vxpose.xlu0.b32.cont [3/16] %v122, 128
    %140 = vxpose.xlu0.b32.cont [4/16] %v123, 128
    %141 = vxpose.xlu0.b32.cont [5/16] %v124, 128
    %142 = vxpose.xlu0.b32.cont [6/16] %v125, 128
    %143 = vxpose.xlu0.b32.cont [7/16] %v126, 128
    %144 = vxpose.xlu0.b32.cont [8/16] %v127, 128
    %145 = vxpose.xlu0.b32.cont [9/16] %v128, 128
    %146 = vxpose.xlu0.b32.cont [10/16] %v129, 128
    %147 = vxpose.xlu0.b32.cont [11/16] %v130, 128
    %148 = vxpose.xlu0.b32.cont [12/16] %v131, 128
    %149 = vxpose.xlu0.b32.cont [13/16] %v132, 128
    %150 = vxpose.xlu0.b32.cont [14/16] %v133, 128
    %151 = vxpose.xlu0.b32.cont [15/16] %v134, 128
    %152 = vxpose.xlu0.b32.end [16/16] %v135, 128
    %v153 = vpop.trf.xlu0
    %v154 = vpop.trf.xlu0
    %v155 = vpop.trf.xlu0
    %v156 = vpop.trf.xlu0
    %v157 = vpop.trf.xlu0
    %v158 = vpop.trf.xlu0
    %v159 = vpop.trf.xlu0
    %v160 = vpop.trf.xlu0
    %v161 = vpop.trf.xlu0
    %v162 = vpop.trf.xlu0
    %v163 = vpop.trf.xlu0
    %v164 = vpop.trf.xlu0
    %v165 = vpop.trf.xlu0
    %v166 = vpop.trf.xlu0
    %v167 = vpop.trf.xlu0
    %v168 = vpop.trf.xlu0
    %v169 = vstv %s136
    %v170 = vadd.f32 %v153, %v169
    %171 = vst [vmem:[#allocation7] sm:$0x1] %v170
    // Predicated region
    $region18: #{tpu_custom_call.1} parent=1 // pred_check
      _
    $region19: #{tpu_custom_call.1} parent=1 // pred_check_branch
      %173 = sbr.rel (0) target = $region21
    $region20: #{tpu_custom_call.1} parent=1 // pred_region
      %175 = vsyncadd [#allocation6], 0
      %s177 = sshll.u32 [#allocation7], 4
      %s178 = int_to_ptr.vmem [resolvable:$true] %s177
      %s179 = sshll.u32 %s3, 4
      %s180 = int_to_ptr.hbm [resolvable:$true] %s179
      %182 = dma.vmem_to_hbm [thread:$0]  %s178, 16, %s180, [#allocation6]
    $region21: #{tpu_custom_call.1} parent=1 // pred_fallthru
      _
    // Predicated region
    $region22: #{tpu_custom_call.1} parent=1 // pred_check
      _
    $region23: #{tpu_custom_call.1} parent=1 // pred_check_branch
      %184 = sbr.rel (0) target = $region25
    $region24: #{tpu_custom_call.1} parent=1 // pred_region
      %186 = dma.done [#allocation6], 16
    $region25: #{tpu_custom_call.1} parent=1 // pred_fallthru
      _
    %187 = vsyncpa [#allocation5], 1
    %188 = vsyncpa [#allocation6], 1

</llo_original>
